<compile_context>
chip_gen: v7x
topology: tpu7x:2x2x1
jax: 0.10.0
libtpu: 0.0.40
codegen_flags: <defaults>
</compile_context>

<pallas_src>
import jax
import jax.numpy as jnp
import numpy as np
from jax.experimental import pallas as pl
from jax.experimental.pallas import tpu as pltpu


def _mpe_kernel(x_ref, emb_ref, expand_ref, fc_ref, o_ref):
    # x_ref:      (BD, 1)   motion value per (batch, degree) row
    # emb_ref:    (2, E)    row 0 = Linear(1, E) weight, row 1 = bias
    # expand_ref: (R, BD)   constant 0/1 row-expansion matrix (row r -> its (b, d))
    # fc_ref:     (R, 2)    col 0 = per-row Conv1d(1, S, 1) weight, col 1 = bias
    # o_ref:      (R, E)
    x_col = x_ref[...]                       # (BD, 1) f32
    emb_w = emb_ref[0:1, :]                  # (1, E)
    emb_b = emb_ref[1:2, :]                  # (1, E)

    # Stage 1: emb_nn + relu, computed once per (b, d) row on the VPU.
    y = jnp.maximum(x_col * emb_w + emb_b, 0.0)                   # (BD, E)

    # Expand (BD, E) -> (R, E) via a constant 0/1 matmul on the idle MXU:
    # exact row copies, no sublane relayout, no S-fold recompute of stage 1.
    y_rep = jnp.dot(expand_ref[...], y,
                    preferred_element_type=jnp.float32)           # (R, E)

    # Stage 2: per-degree 1x1 conv + relu (pure VPU multiply-add).
    fc = fc_ref[...]                         # (R, 2)
    fcw = fc[:, 0:1]                         # (R, 1)
    fcb = fc[:, 1:2]                         # (R, 1)
    o_ref[...] = jnp.maximum(fcw * y_rep + fcb, 0.0).astype(o_ref.dtype)


def make_motion_parameters_encoder(emb_w, emb_b, fc_w, fc_b, batch_size):
    """Build forward(x) with all weight-dependent packing hoisted to init time."""
    E = int(emb_w.shape[0])
    D, S = int(fc_w.shape[0]), int(fc_w.shape[1])
    B = int(batch_size)
    BD = B * D
    R = BD * S          # output rows; r = b*D*S + d*S + s = (b*D + d)*S + s

    # --- One-time parameter packing (outside the per-call path) -------------
    emb_wb = jnp.asarray(
        np.stack([np.asarray(emb_w, np.float32),
                  np.asarray(emb_b, np.float32)], axis=0))                    # (2, E)
    fcw_rows = np.tile(np.asarray(fc_w, np.float32).reshape(D * S), B)        # fc_w[d, s] per row
    fcb_rows = np.tile(np.asarray(fc_b, np.float32).reshape(D * S), B)        # fc_b[d, s] per row
    fc_packed = jnp.asarray(np.stack([fcw_rows, fcb_rows], axis=1))           # (R, 2)
    # 0/1 expansion matrix: output row r = (b*D + d)*S + s copies stage-1 row b*D + d.
    expand = jnp.asarray(np.kron(np.eye(BD, dtype=np.float32),
                                 np.ones((S, 1), dtype=np.float32)))          # (R, BD)

    vmem = pl.BlockSpec(memory_space=pltpu.MemorySpace.VMEM)
    call = pl.pallas_call(
        _mpe_kernel,
        out_shape=jax.ShapeDtypeStruct((R, E), jnp.float32),
        in_specs=[vmem, vmem, vmem, vmem],
        out_specs=vmem,
        cost_estimate=pl.CostEstimate(
            flops=2 * BD * E + 2 * R * BD * E + 3 * R * E,
            transcendentals=0,
            bytes_accessed=4 * (R * E + R * BD + 2 * R + 2 * E + BD),
        ),
    )

    @jax.jit
    def forward(x):
        # (B, 1, D) -> (B*D, 1): contiguous reshape, free.
        x2 = x.reshape(BD, 1).astype(jnp.float32)
        out2d = call(x2, emb_wb, expand, fc_packed)               # (R, E)
        # Contiguous reshape (free): r = b*(D*S) + (d*S + s) -> (B, D*S, E),
        # identical ordering to torch.cat(chunks, dim=1).
        return out2d.reshape(B, D * S, E)

    return forward


def reference(x, emb_w, emb_b, fc_w, fc_b):
    """Pure-JAX reference mirroring the PyTorch forward."""
    B, _, D = x.shape
    E = emb_w.shape[0]
    S = fc_w.shape[1]
    xt = jnp.transpose(x, (0, 2, 1))                                        # (B, D, 1)
    y = jax.nn.relu(xt * emb_w.reshape(1, 1, E) + emb_b.reshape(1, 1, E))   # (B, D, E)
    out = jax.nn.relu(fc_w[None, :, :, None] * y[:, :, None, :]
                      + fc_b[None, :, :, None])                             # (B, D, S, E)
    return out.reshape(B, D * S, E)


if __name__ == "__main__":
    seq_length, emb_dim, degrees = 60, 128, 6
    S = seq_length // degrees
    B = 2

    key = jax.random.PRNGKey(0)
    k1, k2, k3, k4, k5 = jax.random.split(key, 5)
    # Deterministic synthetic params (PyTorch default init range, fan_in=1).
    emb_w = jax.random.uniform(k1, (emb_dim,), jnp.float32, -1.0, 1.0)    # Linear(1, E).weight flattened
    emb_b = jax.random.uniform(k2, (emb_dim,), jnp.float32, -1.0, 1.0)    # Linear(1, E).bias
    fc_w = jax.random.uniform(k3, (degrees, S), jnp.float32, -1.0, 1.0)   # per-degree Conv1d(1, S, 1).weight
    fc_b = jax.random.uniform(k4, (degrees, S), jnp.float32, -1.0, 1.0)   # per-degree Conv1d(1, S, 1).bias
    x = jax.random.normal(k5, (B, 1, degrees), jnp.float32)

    forward = make_motion_parameters_encoder(emb_w, emb_b, fc_w, fc_b, B)
    out = jax.block_until_ready(forward(x))

    ref = reference(x, emb_w, emb_b, fc_w, fc_b)
    assert out.shape == (B, seq_length, emb_dim), out.shape
    np.testing.assert_allclose(np.asarray(out), np.asarray(ref), rtol=1e-5, atol=1e-5)
    print("KERNEL_OK")
</pallas_src>

<mosaic_0001>
module attributes {stable_mosaic.version = 11 : i64} {
  func.func @_mpe_kernel(%arg0: memref<12x1xf32, #tpu.memory_space<vmem>>, %arg1: memref<2x128xf32, #tpu.memory_space<vmem>>, %arg2: memref<120x12xf32, #tpu.memory_space<vmem>>, %arg3: memref<120x2xf32, #tpu.memory_space<vmem>>, %arg4: memref<120x128xf32, #tpu.memory_space<vmem>>) attributes {dimension_semantics = [], scalar_prefetch = 0 : i64, scratch_operands = 0 : i64, tpu.core_type = #tpu.core_type<tc>} {
    %c0 = arith.constant 0 : index
    %c0_0 = arith.constant 0 : index
    %0 = vector.load %arg0[%c0, %c0_0] : memref<12x1xf32, #tpu.memory_space<vmem>>, vector<12x1xf32>
    %c0_1 = arith.constant 0 : index
    %c0_2 = arith.constant 0 : index
    %1 = vector.load %arg1[%c0_1, %c0_2] : memref<2x128xf32, #tpu.memory_space<vmem>>, vector<1x128xf32>
    %c1 = arith.constant 1 : index
    %c0_3 = arith.constant 0 : index
    %2 = vector.load %arg1[%c1, %c0_3] : memref<2x128xf32, #tpu.memory_space<vmem>>, vector<1x128xf32>
    %3 = vector.broadcast %0 : vector<12x1xf32> to vector<12x128xf32>
    %4 = vector.broadcast %1 : vector<1x128xf32> to vector<12x128xf32>
    %5 = arith.mulf %3, %4 : vector<12x128xf32>
    %6 = vector.broadcast %2 : vector<1x128xf32> to vector<12x128xf32>
    %7 = arith.addf %5, %6 : vector<12x128xf32>
    %cst = arith.constant 0.000000e+00 : f32
    %8 = vector.broadcast %cst : f32 to vector<12x128xf32>
    %9 = arith.maximumf %7, %8 : vector<12x128xf32>
    %c0_4 = arith.constant 0 : index
    %c0_5 = arith.constant 0 : index
    %10 = vector.load %arg2[%c0_4, %c0_5] : memref<120x12xf32, #tpu.memory_space<vmem>>, vector<120x12xf32>
    %cst_6 = arith.constant dense<0.000000e+00> : vector<120x128xf32>
    %11 = tpu.matmul %10, %9, %cst_6 {dimension_numbers = #tpu.dot_dimension_numbers<[1], [0], [0], [1], [0, 0, 1, 1], [], []>} : vector<120x12xf32>, vector<12x128xf32>, vector<120x128xf32> -> vector<120x128xf32>
    %c0_7 = arith.constant 0 : index
    %c0_8 = arith.constant 0 : index
    %12 = vector.load %arg3[%c0_7, %c0_8] : memref<120x2xf32, #tpu.memory_space<vmem>>, vector<120x2xf32>
    %13 = vector.extract_strided_slice %12 {offsets = [0, 0], sizes = [120, 1], strides = [1, 1]} : vector<120x2xf32> to vector<120x1xf32>
    %14 = vector.extract_strided_slice %12 {offsets = [0, 1], sizes = [120, 1], strides = [1, 1]} : vector<120x2xf32> to vector<120x1xf32>
    %15 = vector.broadcast %13 : vector<120x1xf32> to vector<120x128xf32>
    %16 = arith.mulf %15, %11 : vector<120x128xf32>
    %17 = vector.broadcast %14 : vector<120x1xf32> to vector<120x128xf32>
    %18 = arith.addf %16, %17 : vector<120x128xf32>
    %cst_9 = arith.constant 0.000000e+00 : f32
    %19 = vector.broadcast %cst_9 : f32 to vector<120x128xf32>
    %20 = arith.maximumf %18, %19 : vector<120x128xf32>
    %c0_10 = arith.constant 0 : index
    %c0_11 = arith.constant 0 : index
    %21 = vector.load %arg4[%c0_10, %c0_11] : memref<120x128xf32, #tpu.memory_space<vmem>>, vector<120x128xf32>
    tpu.vector_store %arg4[%c0_10, %c0_11], %20 {strides = array<i32>} : memref<120x128xf32, #tpu.memory_space<vmem>>, vector<120x128xf32>,
    return
  }
}

</mosaic_0001>

<llo_original>
// kernel: forward.1
$region0: #{forward.1}
  #allocation0 [shape = 'u32[]', space=smem, size = 0x4, offset = 0x4, fixed_abs, tag = 'smem constant byte address 0x4 - core index']
  #allocation1 [shape = 'u32[144,128]{1,0:T(1,128)}', space=vmem, size = 0x12000, scoped, tag = 'internal scratch']
  %s0 = inlined_call_operand.vmem [shape: f32[12,1], index: 0, kind: input, shape index: {}]
  %s1 = inlined_call_operand.vmem [shape: f32[2,128], index: 1, kind: input, shape index: {}]
  %s2 = inlined_call_operand.hbm [shape: f32[120,12], index: 2, kind: input, shape index: {}]
  %s3 = inlined_call_operand.hbm [shape: f32[120,2], index: 3, kind: input, shape index: {}]
  %s4 = inlined_call_operand.vmem [shape: f32[120,128], index: 4, kind: output, shape index: {}]
  %s5 = sld [smem:[#allocation0]]
  $region34: #{forward.1} parent=0
    _
  %s7 = ssub.s32 1, %s5
  %s8 = scalar_select 0, %s7, %s5
  $region1: #{forward.1} parent=0
    #allocation2 [shape = 'u8[61440]{0}', space=vmem, size = 0xf000, scoped, tag = 'input window, operand 2, single buffered']
    #allocation3 [shape = 's32[1]{0}', space=sflag, size = 0x4, scoped, tag = 'scoped memory for forward.1']
    #allocation4 [shape = 'u8[61440]{0}', space=vmem, size = 0xf000, scoped, tag = 'input window, operand 3, single buffered']
    #allocation5 [shape = 's32[1]{0}', space=sflag, size = 0x4, scoped, tag = 'scoped memory for forward.1']
    %9 = vsyncpa [#allocation3], 0
    %10 = vsyncpa [#allocation5], 0
    // Predicated region
    $region2: #{forward.1} parent=1 // pred_check
      _
    $region3: #{forward.1} parent=1 // pred_check_branch
      %12 = sbr.rel (0) target = $region5
    $region4: #{forward.1} parent=1 // pred_region
      _
    $region5: #{forward.1} parent=1 // pred_fallthru
      _
    // Predicated region
    $region6: #{forward.1} parent=1 // pred_check
      _
    $region7: #{forward.1} parent=1 // pred_check_branch
      %14 = sbr.rel (0) target = $region9
    $region8: #{forward.1} parent=1 // pred_region
      _
    $region9: #{forward.1} parent=1 // pred_fallthru
      _
    // Predicated region
    $region10: #{forward.1} parent=1 // pred_check
      _
    $region11: #{forward.1} parent=1 // pred_check_branch
      %16 = sbr.rel (0) target = $region13
    $region12: #{forward.1} parent=1 // pred_region
      %s18 = ssub.s32 1920, 1920
      %19 = vsyncadd [#allocation3], %s18
      %s20 = sshll.u32 [#allocation2], 4
      %s21 = int_to_ptr.vmem [resolvable:$true] %s20
      %26 = dma.hbm_to_vmem [thread:$0]  %s2, 1920, %s21, [#allocation3], 128, 128, 8
    $region13: #{forward.1} parent=1 // pred_fallthru
      _
    // Predicated region
    $region14: #{forward.1} parent=1 // pred_check
      _
    $region15: #{forward.1} parent=1 // pred_check_branch
      %28 = sbr.rel (0) target = $region17
    $region16: #{forward.1} parent=1 // pred_region
      %s30 = ssub.s32 1920, 1920
      %31 = vsyncadd [#allocation5], %s30
      %s32 = sshll.u32 [#allocation4], 4
      %s33 = int_to_ptr.vmem [resolvable:$true] %s32
      %38 = dma.hbm_to_vmem [thread:$0]  %s3, 1920, %s33, [#allocation5], 128, 128, 8
    $region17: #{forward.1} parent=1 // pred_fallthru
      _
    // Predicated region
    $region18: #{forward.1} parent=1 // pred_check
      _
    $region19: #{forward.1} parent=1 // pred_check_branch
      %40 = sbr.rel (0) target = $region21
    $region20: #{forward.1} parent=1 // pred_region
      %41 = dma.done [#allocation3], 1920
    $region21: #{forward.1} parent=1 // pred_fallthru
      _
    // Predicated region
    $region22: #{forward.1} parent=1 // pred_check
      _
    $region23: #{forward.1} parent=1 // pred_check_branch
      %43 = sbr.rel (0) target = $region25
    $region24: #{forward.1} parent=1 // pred_region
      %44 = dma.done [#allocation5], 1920
    $region25: #{forward.1} parent=1 // pred_fallthru
      _
    %v45 = vld [vmem:[%s0] sm:$0xff]
    %v46 = vld [vmem:[%s0 + $0x8] sm:$0xf]
    %v47 = vld [vmem:[%s1] sm:$0x1]
    %v48 = vld [vmem:[%s1 + $0x1] sm:$0x1]
    %50 = vset.pattern.permute.xlu0 0
    %51 = vperm.xlu0 %50, %v45
    %v52 = vpop.permute.xlu0 %51
    %55 = vset.pattern.permute.xlu0 0
    %56 = vperm.xlu0 %55, %v46
    %v57 = vpop.permute.xlu0 %56
    %v59 = vlaneseq
    %v60 = vshrl.u32 %v59, 7
    %v61 = vsub.s32 0, %v60
    %v62 = vrot.slane %v47, %v61
    %v63 = vmul.f32 %v52, %v62
    %v64 = vmul.f32 %v57, %v62
    %v65 = vlaneseq
    %v66 = vshrl.u32 %v65, 7
    %v67 = vsub.s32 0, %v66
    %v68 = vrot.slane %v48, %v67
    %v69 = vadd.f32 %v63, %v68
    %v70 = vadd.f32 %v64, %v68
    %v71 = vmax.f32 %v69, 0.0
    %v72 = vmax.f32 %v70, 0.0
    %v73 = vld [vmem:[#allocation2] sm:$0xff]
    %v74 = vld [vmem:[#allocation2 + $0x8] sm:$0xff]
    %v75 = vld [vmem:[#allocation2 + $0x10] sm:$0xff]
    %v76 = vld [vmem:[#allocation2 + $0x18] sm:$0xff]
    %v77 = vld [vmem:[#allocation2 + $0x20] sm:$0xff]
    %v78 = vld [vmem:[#allocation2 + $0x28] sm:$0xff]
    %v79 = vld [vmem:[#allocation2 + $0x30] sm:$0xff]
    %v80 = vld [vmem:[#allocation2 + $0x38] sm:$0xff]
    %v81 = vld [vmem:[#allocation2 + $0x40] sm:$0xff]
    %v82 = vld [vmem:[#allocation2 + $0x48] sm:$0xff]
    %v83 = vld [vmem:[#allocation2 + $0x50] sm:$0xff]
    %v84 = vld [vmem:[#allocation2 + $0x58] sm:$0xff]
    %v85 = vld [vmem:[#allocation2 + $0x60] sm:$0xff]
    %v86 = vld [vmem:[#allocation2 + $0x68] sm:$0xff]
    %v87 = vld [vmem:[#allocation2 + $0x70] sm:$0xff]
    %vm88 = vcmask 97280
    %v90 = vsel %vm88, %v73, 0
    %v93 = vsel %vm88, %v74, 0
    %v96 = vsel %vm88, %v75, 0
    %v99 = vsel %vm88, %v76, 0
    %v102 = vsel %vm88, %v77, 0
    %v105 = vsel %vm88, %v78, 0
    %v108 = vsel %vm88, %v79, 0
    %v111 = vsel %vm88, %v80, 0
    %v114 = vsel %vm88, %v81, 0
    %v117 = vsel %vm88, %v82, 0
    %v120 = vsel %vm88, %v83, 0
    %v123 = vsel %vm88, %v84, 0
    %v126 = vsel %vm88, %v85, 0
    %v129 = vsel %vm88, %v86, 0
    %v132 = vsel %vm88, %v87, 0
    %vm134 = vcmask 1043456
    %v136 = vsel %vm134, %v72, 0
    %138 = vmatprep.subr.mxu0 0.0
    %139 = vmatpush1.msra.mxu0 %v71
    %140 = vmatprep.subr.mxu0 0.0
    %141 = vmatpush1.msra.mxu0 %v136
    %142 = vmatprep.subr.mxu0 0.0
    %143 = vmatpush1.msra.mxu0 0.0
    %144 = vmatprep.subr.mxu0 0.0
    %145 = vmatpush1.msra.mxu0 0.0
    %146 = vmatprep.subr.mxu0 0.0
    %147 = vmatpush1.msra.mxu0 0.0
    %148 = vmatprep.subr.mxu0 0.0
    %149 = vmatpush1.msra.mxu0 0.0
    %150 = vmatprep.subr.mxu0 0.0
    %151 = vmatpush1.msra.mxu0 0.0
    %152 = vmatprep.subr.mxu0 0.0
    %153 = vmatpush1.msra.mxu0 0.0
    %154 = vmatprep.subr.mxu0 0.0
    %155 = vmatpush1.msra.mxu0 0.0
    %156 = vmatprep.subr.mxu0 0.0
    %157 = vmatpush1.msra.mxu0 0.0
    %158 = vmatprep.subr.mxu0 0.0
    %159 = vmatpush1.msra.mxu0 0.0
    %160 = vmatprep.subr.mxu0 0.0
    %161 = vmatpush1.msra.mxu0 0.0
    %162 = vmatprep.subr.mxu0 0.0
    %163 = vmatpush1.msra.mxu0 0.0
    %164 = vmatprep.subr.mxu0 0.0
    %165 = vmatpush1.msra.mxu0 0.0
    %166 = vmatprep.subr.mxu0 0.0
    %167 = vmatpush1.msra.mxu0 0.0
    %168 = vmatprep.subr.mxu0 0.0
    %169 = vmatpush1.msra.mxu0 0.0
    %170 = vmatprep.subr.mxu0 0.0
    %171 = vmatpush1.msra.mxu0 0.0
    %172 = vmatprep.subr.mxu0 0.0
    %173 = vmatpush1.msra.mxu0 0.0
    %174 = vmatprep.subr.mxu0 0.0
    %175 = vmatpush1.msra.mxu0 0.0
    %176 = vmatprep.subr.mxu0 0.0
    %177 = vmatpush1.msra.mxu0 0.0
    %178 = vmatprep.subr.mxu0 0.0
    %179 = vmatpush1.msra.mxu0 0.0
    %180 = vmatprep.subr.mxu0 0.0
    %181 = vmatpush1.msra.mxu0 0.0
    %182 = vmatprep.subr.mxu0 0.0
    %183 = vmatpush1.msra.mxu0 0.0
    %184 = vmatprep.subr.mxu0 0.0
    %185 = vmatpush1.msra.mxu0 0.0
    %186 = vmatprep.subr.mxu0 0.0
    %187 = vmatpush1.msra.mxu0 0.0
    %188 = vmatprep.subr.mxu0 0.0
    %189 = vmatpush1.msra.mxu0 0.0
    %190 = vmatprep.subr.mxu0 0.0
    %191 = vmatpush1.msra.mxu0 0.0
    %192 = vmatprep.subr.mxu0 0.0
    %193 = vmatpush1.msra.mxu0 0.0
    %194 = vmatprep.subr.mxu0 0.0
    %195 = vmatpush1.msra.mxu0 0.0
    %196 = vmatprep.subr.mxu0 0.0
    %197 = vmatpush1.msra.mxu0 0.0
    %198 = vmatprep.subr.mxu0 0.0
    %199 = vmatpush1.msra.mxu0 0.0
    %200 = vmatprep.subr.mxu0 0.0
    %201 = vmatpush1.msra.mxu0 0.0
    %202 = vmatprep.mubr.f32.mxu0 0.0
    %203 = vmatmul.mubr.f32.gmra.mrb[0].mxu0 %v90
    %v204 = vpop.f32.mrb[0].mxu0
    %v205 = vadd.f32 0.0, %v204
    %v206 = vpop.f32.mrb[0].mxu0
    %207 = vmatprep.mubr.f32.mxu0 0.0
    %208 = vmatmul.mubr.f32.gmra.mrb[0].mxu0 %v93
    %v209 = vpop.f32.mrb[0].mxu0
    %v210 = vadd.f32 0.0, %v209
    %v211 = vpop.f32.mrb[0].mxu0
    %212 = vmatprep.mubr.f32.mxu0 0.0
    %213 = vmatmul.mubr.f32.gmra.mrb[0].mxu0 %v96
    %v214 = vpop.f32.mrb[0].mxu0
    %v215 = vadd.f32 0.0, %v214
    %v216 = vpop.f32.mrb[0].mxu0
    %217 = vmatprep.mubr.f32.mxu0 0.0
    %218 = vmatmul.mubr.f32.gmra.mrb[0].mxu0 %v99
    %v219 = vpop.f32.mrb[0].mxu0
    %v220 = vadd.f32 0.0, %v219
    %v221 = vpop.f32.mrb[0].mxu0
    %222 = vmatprep.mubr.f32.mxu0 0.0
    %223 = vmatmul.mubr.f32.gmra.mrb[0].mxu0 %v102
    %v224 = vpop.f32.mrb[0].mxu0
    %v225 = vadd.f32 0.0, %v224
    %v226 = vpop.f32.mrb[0].mxu0
    %227 = vmatprep.mubr.f32.mxu0 0.0
    %228 = vmatmul.mubr.f32.gmra.mrb[0].mxu0 %v105
    %v229 = vpop.f32.mrb[0].mxu0
    %v230 = vadd.f32 0.0, %v229
    %v231 = vpop.f32.mrb[0].mxu0
    %232 = vmatprep.mubr.f32.mxu0 0.0
    %233 = vmatmul.mubr.f32.gmra.mrb[0].mxu0 %v108
    %v234 = vpop.f32.mrb[0].mxu0
    %v235 = vadd.f32 0.0, %v234
    %v236 = vpop.f32.mrb[0].mxu0
    %237 = vmatprep.mubr.f32.mxu0 0.0
    %238 = vmatmul.mubr.f32.gmra.mrb[0].mxu0 %v111
    %v239 = vpop.f32.mrb[0].mxu0
    %v240 = vadd.f32 0.0, %v239
    %v241 = vpop.f32.mrb[0].mxu0
    %242 = vmatprep.mubr.f32.mxu0 0.0
    %243 = vmatmul.mubr.f32.gmra.mrb[0].mxu0 %v114
    %v244 = vpop.f32.mrb[0].mxu0
    %v245 = vadd.f32 0.0, %v244
    %v246 = vpop.f32.mrb[0].mxu0
    %247 = vmatprep.mubr.f32.mxu0 0.0
    %248 = vmatmul.mubr.f32.gmra.mrb[0].mxu0 %v117
    %v249 = vpop.f32.mrb[0].mxu0
    %v250 = vadd.f32 0.0, %v249
    %v251 = vpop.f32.mrb[0].mxu0
    %252 = vmatprep.mubr.f32.mxu0 0.0
    %253 = vmatmul.mubr.f32.gmra.mrb[0].mxu0 %v120
    %v254 = vpop.f32.mrb[0].mxu0
    %v255 = vadd.f32 0.0, %v254
    %v256 = vpop.f32.mrb[0].mxu0
    %257 = vmatprep.mubr.f32.mxu0 0.0
    %258 = vmatmul.mubr.f32.gmra.mrb[0].mxu0 %v123
    %v259 = vpop.f32.mrb[0].mxu0
    %v260 = vadd.f32 0.0, %v259
    %v261 = vpop.f32.mrb[0].mxu0
    %262 = vmatprep.mubr.f32.mxu0 0.0
    %263 = vmatmul.mubr.f32.gmra.mrb[0].mxu0 %v126
    %v264 = vpop.f32.mrb[0].mxu0
    %v265 = vadd.f32 0.0, %v264
    %v266 = vpop.f32.mrb[0].mxu0
    %267 = vmatprep.mubr.f32.mxu0 0.0
    %268 = vmatmul.mubr.f32.gmra.mrb[0].mxu0 %v129
    %v269 = vpop.f32.mrb[0].mxu0
    %v270 = vadd.f32 0.0, %v269
    %v271 = vpop.f32.mrb[0].mxu0
    %272 = vmatprep.mubr.f32.mxu0 0.0
    %273 = vmatmul.mubr.f32.gmra.mrb[0].mxu0 %v132
    %v274 = vpop.f32.mrb[0].mxu0
    %v275 = vadd.f32 0.0, %v274
    %v276 = vpop.f32.mrb[0].mxu0
    %277 = vdwg.mxu0
    %v278 = vld [vmem:[#allocation4] sm:$0xff]
    %v279 = vld [vmem:[#allocation4 + $0x8] sm:$0xff]
    %v280 = vld [vmem:[#allocation4 + $0x10] sm:$0xff]
    %v281 = vld [vmem:[#allocation4 + $0x18] sm:$0xff]
    %v282 = vld [vmem:[#allocation4 + $0x20] sm:$0xff]
    %v283 = vld [vmem:[#allocation4 + $0x28] sm:$0xff]
    %v284 = vld [vmem:[#allocation4 + $0x30] sm:$0xff]
    %v285 = vld [vmem:[#allocation4 + $0x38] sm:$0xff]
    %v286 = vld [vmem:[#allocation4 + $0x40] sm:$0xff]
    %v287 = vld [vmem:[#allocation4 + $0x48] sm:$0xff]
    %v288 = vld [vmem:[#allocation4 + $0x50] sm:$0xff]
    %v289 = vld [vmem:[#allocation4 + $0x58] sm:$0xff]
    %v290 = vld [vmem:[#allocation4 + $0x60] sm:$0xff]
    %v291 = vld [vmem:[#allocation4 + $0x68] sm:$0xff]
    %v292 = vld [vmem:[#allocation4 + $0x70] sm:$0xff]
    %294 = vset.pattern.permute.xlu0 0
    %295 = vperm.xlu0 %294, %v278
    %v296 = vpop.permute.xlu0 %295
    %299 = vset.pattern.permute.xlu0 0
    %300 = vperm.xlu0 %299, %v279
    %v301 = vpop.permute.xlu0 %300
    %304 = vset.pattern.permute.xlu0 0
    %305 = vperm.xlu0 %304, %v280
    %v306 = vpop.permute.xlu0 %305
    %309 = vset.pattern.permute.xlu0 0
    %310 = vperm.xlu0 %309, %v281
    %v311 = vpop.permute.xlu0 %310
    %314 = vset.pattern.permute.xlu0 0
    %315 = vperm.xlu0 %314, %v282
    %v316 = vpop.permute.xlu0 %315
    %319 = vset.pattern.permute.xlu0 0
    %320 = vperm.xlu0 %319, %v283
    %v321 = vpop.permute.xlu0 %320
    %324 = vset.pattern.permute.xlu0 0
    %325 = vperm.xlu0 %324, %v284
    %v326 = vpop.permute.xlu0 %325
    %329 = vset.pattern.permute.xlu0 0
    %330 = vperm.xlu0 %329, %v285
    %v331 = vpop.permute.xlu0 %330
    %334 = vset.pattern.permute.xlu0 0
    %335 = vperm.xlu0 %334, %v286
    %v336 = vpop.permute.xlu0 %335
    %339 = vset.pattern.permute.xlu0 0
    %340 = vperm.xlu0 %339, %v287
    %v341 = vpop.permute.xlu0 %340
    %344 = vset.pattern.permute.xlu0 0
    %345 = vperm.xlu0 %344, %v288
    %v346 = vpop.permute.xlu0 %345
    %349 = vset.pattern.permute.xlu0 0
    %350 = vperm.xlu0 %349, %v289
    %v351 = vpop.permute.xlu0 %350
    %354 = vset.pattern.permute.xlu0 0
    %355 = vperm.xlu0 %354, %v290
    %v356 = vpop.permute.xlu0 %355
    %359 = vset.pattern.permute.xlu0 0
    %360 = vperm.xlu0 %359, %v291
    %v361 = vpop.permute.xlu0 %360
    %364 = vset.pattern.permute.xlu0 0
    %365 = vperm.xlu0 %364, %v292
    %v366 = vpop.permute.xlu0 %365
    %v368 = vmul.f32 %v296, %v205
    %v369 = vmul.f32 %v301, %v210
    %v370 = vmul.f32 %v306, %v215
    %v371 = vmul.f32 %v311, %v220
    %v372 = vmul.f32 %v316, %v225
    %v373 = vmul.f32 %v321, %v230
    %v374 = vmul.f32 %v326, %v235
    %v375 = vmul.f32 %v331, %v240
    %v376 = vmul.f32 %v336, %v245
    %v377 = vmul.f32 %v341, %v250
    %v378 = vmul.f32 %v346, %v255
    %v379 = vmul.f32 %v351, %v260
    %v380 = vmul.f32 %v356, %v265
    %v381 = vmul.f32 %v361, %v270
    %v382 = vmul.f32 %v366, %v275
    %383 = vset.pattern.permute.xlu0 1
    %384 = vperm.xlu0 %383, %v278
    %v385 = vpop.permute.xlu0 %384
    %387 = vset.pattern.permute.xlu0 1
    %388 = vperm.xlu0 %387, %v279
    %v389 = vpop.permute.xlu0 %388
    %391 = vset.pattern.permute.xlu0 1
    %392 = vperm.xlu0 %391, %v280
    %v393 = vpop.permute.xlu0 %392
    %395 = vset.pattern.permute.xlu0 1
    %396 = vperm.xlu0 %395, %v281
    %v397 = vpop.permute.xlu0 %396
    %399 = vset.pattern.permute.xlu0 1
    %400 = vperm.xlu0 %399, %v282
    %v401 = vpop.permute.xlu0 %400
    %403 = vset.pattern.permute.xlu0 1
    %404 = vperm.xlu0 %403, %v283
    %v405 = vpop.permute.xlu0 %404
    %407 = vset.pattern.permute.xlu0 1
    %408 = vperm.xlu0 %407, %v284
    %v409 = vpop.permute.xlu0 %408
    %411 = vset.pattern.permute.xlu0 1
    %412 = vperm.xlu0 %411, %v285
    %v413 = vpop.permute.xlu0 %412
    %415 = vset.pattern.permute.xlu0 1
    %416 = vperm.xlu0 %415, %v286
    %v417 = vpop.permute.xlu0 %416
    %419 = vset.pattern.permute.xlu0 1
    %420 = vperm.xlu0 %419, %v287
    %v421 = vpop.permute.xlu0 %420
    %423 = vset.pattern.permute.xlu0 1
    %424 = vperm.xlu0 %423, %v288
    %v425 = vpop.permute.xlu0 %424
    %427 = vset.pattern.permute.xlu0 1
    %428 = vperm.xlu0 %427, %v289
    %v429 = vpop.permute.xlu0 %428
    %431 = vset.pattern.permute.xlu0 1
    %432 = vperm.xlu0 %431, %v290
    %v433 = vpop.permute.xlu0 %432
    %435 = vset.pattern.permute.xlu0 1
    %436 = vperm.xlu0 %435, %v291
    %v437 = vpop.permute.xlu0 %436
    %439 = vset.pattern.permute.xlu0 1
    %440 = vperm.xlu0 %439, %v292
    %v441 = vpop.permute.xlu0 %440
    %v443 = vadd.f32 %v368, %v385
    %v444 = vadd.f32 %v369, %v389
    %v445 = vadd.f32 %v370, %v393
    %v446 = vadd.f32 %v371, %v397
    %v447 = vadd.f32 %v372, %v401
    %v448 = vadd.f32 %v373, %v405
    %v449 = vadd.f32 %v374, %v409
    %v450 = vadd.f32 %v375, %v413
    %v451 = vadd.f32 %v376, %v417
    %v452 = vadd.f32 %v377, %v421
    %v453 = vadd.f32 %v378, %v425
    %v454 = vadd.f32 %v379, %v429
    %v455 = vadd.f32 %v380, %v433
    %v456 = vadd.f32 %v381, %v437
    %v457 = vadd.f32 %v382, %v441
    %v458 = vmax.f32 %v443, 0.0
    %v459 = vmax.f32 %v444, 0.0
    %v460 = vmax.f32 %v445, 0.0
    %v461 = vmax.f32 %v446, 0.0
    %v462 = vmax.f32 %v447, 0.0
    %v463 = vmax.f32 %v448, 0.0
    %v464 = vmax.f32 %v449, 0.0
    %v465 = vmax.f32 %v450, 0.0
    %v466 = vmax.f32 %v451, 0.0
    %v467 = vmax.f32 %v452, 0.0
    %v468 = vmax.f32 %v453, 0.0
    %v469 = vmax.f32 %v454, 0.0
    %v470 = vmax.f32 %v455, 0.0
    %v471 = vmax.f32 %v456, 0.0
    %v472 = vmax.f32 %v457, 0.0
    %473 = vst [vmem:[%s4] sm:$0xff] %v458
    %474 = vst [vmem:[%s4 + $0x8] sm:$0xff] %v459
    %475 = vst [vmem:[%s4 + $0x10] sm:$0xff] %v460
    %476 = vst [vmem:[%s4 + $0x18] sm:$0xff] %v461
    %477 = vst [vmem:[%s4 + $0x20] sm:$0xff] %v462
    %478 = vst [vmem:[%s4 + $0x28] sm:$0xff] %v463
    %479 = vst [vmem:[%s4 + $0x30] sm:$0xff] %v464
    %480 = vst [vmem:[%s4 + $0x38] sm:$0xff] %v465
    %481 = vst [vmem:[%s4 + $0x40] sm:$0xff] %v466
    %482 = vst [vmem:[%s4 + $0x48] sm:$0xff] %v467
    %483 = vst [vmem:[%s4 + $0x50] sm:$0xff] %v468
    %484 = vst [vmem:[%s4 + $0x58] sm:$0xff] %v469
    %485 = vst [vmem:[%s4 + $0x60] sm:$0xff] %v470
    %486 = vst [vmem:[%s4 + $0x68] sm:$0xff] %v471
    %487 = vst [vmem:[%s4 + $0x70] sm:$0xff] %v472
    // Predicated region
    $region26: #{forward.1} parent=1 // pred_check
      _
    $region27: #{forward.1} parent=1 // pred_check_branch
      %489 = sbr.rel (0) target = $region29
    $region28: #{forward.1} parent=1 // pred_region
      _
    $region29: #{forward.1} parent=1 // pred_fallthru
      _
    // Predicated region
    $region30: #{forward.1} parent=1 // pred_check
      _
    $region31: #{forward.1} parent=1 // pred_check_branch
      %491 = sbr.rel (0) target = $region33
    $region32: #{forward.1} parent=1 // pred_region
      _
    $region33: #{forward.1} parent=1 // pred_fallthru
      _
    %492 = vsyncpa [#allocation3], 1
    %493 = vsyncpa [#allocation5], 1

</llo_original>
